<compile_context>
chip_gen: v5e
topology: v5e:2x2
jax: 0.10.0
libtpu: 0.0.40
codegen_flags: <defaults>
</compile_context>

<pallas_src>
import jax
import jax.numpy as jnp
import numpy as np
from jax import lax
from jax.experimental import pallas as pl
from jax.experimental.pallas import tpu as pltpu


def attention_kernel(q_ref, x_ref, pm_ref, mem_ref, maskadd_ref,
                     wq_ref, wloc_ref, wv_ref,
                     ctx_ref, attw_ref):
    # Per-grid-step block shapes (Bb = batch block):
    #   q_ref       : (Bb, 1, D_rnn)
    #   x_ref       : (Bb, T, 2K)      im2col'd prev/cumulative attention weights
    #   pm_ref      : (Bb, T, D_att)   processed_memory
    #   mem_ref     : (Bb, T, E)       memory (encoder outputs)
    #   maskadd_ref : (Bb, 1, T)       additive mask: 0 valid, -1e30 padded
    #   wq_ref      : (D_rnn, D_att)   query_layer weight (pre-transposed)
    #   wloc_ref    : (2K, D_att)      folded location conv + dense weight
    #   wv_ref      : (1, D_att)       v weight
    #   ctx_ref     : (Bb, 1, E)
    #   attw_ref    : (Bb, 1, T)
    Bb = x_ref.shape[0]
    twoK, D_att = wloc_ref.shape
    D_rnn = wq_ref.shape[0]

    # Broadcast the small weights along the batch-block (major, untiled) dim so every matmul
    # is a plain batched dot_general — the exact einsum forms Mosaic lowers to MXU matmuls.
    wq = jnp.broadcast_to(wq_ref[...], (Bb, D_rnn, D_att))
    wloc = jnp.broadcast_to(wloc_ref[...], (Bb, twoK, D_att))
    wv = jnp.broadcast_to(wv_ref[...], (Bb, 1, D_att))

    # processed_query = query_layer(query.unsqueeze(1))  -> (Bb, 1, D_att)
    pq = jnp.einsum('bqr,brd->bqd', q_ref[...], wq,
                    preferred_element_type=jnp.float32)

    # location conv + location_dense folded into ONE matmul on the im2col input.
    loc = jnp.einsum('btk,bkd->btd', x_ref[...], wloc,
                     preferred_element_type=jnp.float32)              # (Bb, T, D_att)

    # energies = v(tanh(processed_query + processed_attention_weights + processed_memory))
    # pq broadcasts along the sublane (T) dim of each batch tile — free in the add.
    e = jnp.tanh(pq + loc + pm_ref[...])                              # (Bb, T, D_att)
    align = jnp.einsum('bqd,btd->bqt', wv, e,
                       preferred_element_type=jnp.float32)            # (Bb, 1, T)

    # masked softmax over T (finite additive mask -> no NaN even for fully-masked rows)
    align = align + maskadd_ref[...]
    m = jnp.max(align, axis=-1, keepdims=True)
    ex = jnp.exp(align - m)
    denom = jnp.sum(ex, axis=-1, keepdims=True)
    attw = ex * pl.reciprocal(denom, approx=True)                     # (Bb, 1, T)

    # attention_context = bmm(attention_weights.unsqueeze(1), memory)  -> (Bb, 1, E)
    ctx = jnp.einsum('bqt,bte->bqe', attw, mem_ref[...],
                     preferred_element_type=jnp.float32)

    attw_ref[...] = attw.astype(attw_ref.dtype)
    ctx_ref[...] = ctx.astype(ctx_ref.dtype)


def _pick_block_b(B, T, D_rnn, D_att, twoK, E,
                  vmem_budget_bytes=16 * 1024 * 1024):
    """Largest batch block (<=8) whose double-buffered blocks fit the VMEM budget,
    while keeping >=2 grid steps when B >= 2 (pipeline overlap + megacore sharding)."""
    # f32 bytes of all blocked operands for ONE batch row (q, x, pm, mem, mask, ctx, attw)
    per_row = 4 * (D_rnn + T * (twoK + D_att + E) + T + E + T)
    bb = 8
    if B >= 2:
        bb = min(bb, -(-B // 2))          # ensure at least 2 grid blocks
    bb = min(bb, B)
    while bb > 1 and 2 * bb * per_row > vmem_budget_bytes:   # 2x: double buffering
        bb //= 2
    return max(bb, 1)


def attention_forward(query, attention_weights_cat, processed_memory, memory, mask,
                      w_query, w_conv, w_dense, w_v, *, block_b=None):
    """Pallas forward for Tacotron2 Attention.

    Weights in PyTorch layout:
      w_query (D_att, D_rnn), w_conv (F, 2, K), w_dense (D_att, F), w_v (1, D_att).
    Returns (attention_context (B, E), attention_weights (B, T))."""
    B, T = mask.shape
    D_rnn = query.shape[1]
    D_att = w_query.shape[0]
    F_, _, K = w_conv.shape
    E = memory.shape[2]
    assert K % 2 == 1, "location conv kernel size must be odd for 'same' padding"
    P = (K - 1) // 2

    # ---- wrapper-side glue (layout + one-time weight algebra; XLA, not hot path) ----
    # Fold Conv1d(2->F, K, no bias) and Linear(F->D_att, no bias) into W_loc (2K, D_att):
    #   wc2d[2k+c, f] = w_conv[f, c, k];  W_loc = wc2d @ w_dense^T
    wc2d = jnp.transpose(w_conv, (2, 1, 0)).reshape(2 * K, F_)
    w_loc = wc2d @ w_dense.T                                           # (2K, D_att)
    wq_t = jnp.transpose(w_query)                                      # (D_rnn, D_att)

    # im2col of the zero-padded attention-weight channels: x[b, t, 2k+c] = xpad[b, c, t+k]
    xpad = jnp.pad(attention_weights_cat, ((0, 0), (0, 0), (P, P)))    # (B, 2, T+2P)
    cols = jnp.stack([xpad[:, :, k:k + T] for k in range(K)], axis=1)  # (B, K, 2, T)
    x_im2col = jnp.transpose(cols, (0, 3, 1, 2)).reshape(B, T, 2 * K)  # (B, T, 2K)

    # additive mask; -1e30 keeps masked weights at exactly 0 after softmax, no NaNs
    maskadd = jnp.where(mask, -1e30, 0.0).astype(jnp.float32).reshape(B, 1, T)

    q3 = query.reshape(B, 1, D_rnn)

    # ---- batch blocking (amortize per-grid-step overhead, fill sublanes, fit VMEM) ----
    if block_b is None:
        block_b = _pick_block_b(B, T, D_rnn, D_att, 2 * K, E)
    n_blk = -(-B // block_b)
    B_pad = n_blk * block_b
    if B_pad != B:
        bp = ((0, B_pad - B), (0, 0), (0, 0))
        q3 = jnp.pad(q3, bp)
        x_im2col = jnp.pad(x_im2col, bp)
        processed_memory = jnp.pad(processed_memory, bp)
        memory = jnp.pad(memory, bp)
        maskadd = jnp.pad(maskadd, bp)   # padded rows: mask=0 -> uniform softmax, ctx=0

    cost = pl.CostEstimate(
        flops=2 * B_pad * (D_rnn * D_att + T * 2 * K * D_att + T * D_att + T * E),
        transcendentals=B_pad * T * (D_att + 1),
        bytes_accessed=4 * (B_pad * (D_rnn + T * (2 * K + D_att + E + 1) + E + T)
                            + D_rnn * D_att + 2 * K * D_att + D_att),
    )

    ctx, attw = pl.pallas_call(
        attention_kernel,
        out_shape=(jax.ShapeDtypeStruct((B_pad, 1, E), jnp.float32),
                   jax.ShapeDtypeStruct((B_pad, 1, T), jnp.float32)),
        grid=(n_blk,),
        in_specs=[
            pl.BlockSpec((block_b, 1, D_rnn), lambda i: (i, 0, 0)),
            pl.BlockSpec((block_b, T, 2 * K), lambda i: (i, 0, 0)),
            pl.BlockSpec((block_b, T, D_att), lambda i: (i, 0, 0)),
            pl.BlockSpec((block_b, T, E), lambda i: (i, 0, 0)),
            pl.BlockSpec((block_b, 1, T), lambda i: (i, 0, 0)),
            # weights: constant block index -> fetched once, resident across all grid steps
            pl.BlockSpec((D_rnn, D_att), lambda i: (0, 0)),
            pl.BlockSpec((2 * K, D_att), lambda i: (0, 0)),
            pl.BlockSpec((1, D_att), lambda i: (0, 0)),
        ],
        out_specs=(
            pl.BlockSpec((block_b, 1, E), lambda i: (i, 0, 0)),
            pl.BlockSpec((block_b, 1, T), lambda i: (i, 0, 0)),
        ),
        compiler_params=pltpu.CompilerParams(
            dimension_semantics=("parallel",)),
        cost_estimate=cost,
    )(q3, x_im2col, processed_memory, memory, maskadd, wq_t, w_loc, w_v)

    return ctx[:B].reshape(B, E), attw[:B].reshape(B, T)


def attention_reference(query, attention_weights_cat, processed_memory, memory, mask,
                        w_query, w_conv, w_dense, w_v):
    """Pure-JAX reference matching the PyTorch forward."""
    K = w_conv.shape[2]
    P = (K - 1) // 2
    pq = query @ w_query.T                                                  # (B, D_att)
    conv = lax.conv_general_dilated(
        attention_weights_cat, w_conv, window_strides=(1,), padding=[(P, P)],
        dimension_numbers=('NCH', 'OIH', 'NCH'))                            # (B, F, T)
    loc = jnp.einsum('bft,df->btd', conv, w_dense)                          # (B, T, D_att)
    energies = jnp.tanh(pq[:, None, :] + loc + processed_memory) @ w_v.T    # (B, T, 1)
    align = energies[..., 0]
    align = jnp.where(mask, -jnp.inf, align)
    attw = jax.nn.softmax(align, axis=1)
    ctx = jnp.einsum('bt,bte->be', attw, memory)
    return ctx, attw


if __name__ == "__main__":
    B, T = 2, 16
    attention_rnn_dim = 32
    embedding_dim = 32
    attention_dim = 32
    attention_location_n_filters = 8
    attention_location_kernel_size = 5

    key = jax.random.PRNGKey(0)
    k = jax.random.split(key, 10)

    def xavier_uniform(rng, shape, gain=1.0):
        receptive = 1
        for s in shape[2:]:
            receptive *= s
        fan_in = shape[1] * receptive
        fan_out = shape[0] * receptive
        limit = gain * float(np.sqrt(6.0 / (fan_in + fan_out)))
        return jax.random.uniform(rng, shape, jnp.float32, -limit, limit)

    tanh_gain = 5.0 / 3.0
    w_query = xavier_uniform(k[0], (attention_dim, attention_rnn_dim), tanh_gain)
    w_memory = xavier_uniform(k[1], (attention_dim, embedding_dim), tanh_gain)
    w_v = xavier_uniform(k[2], (1, attention_dim), 1.0)
    w_conv = xavier_uniform(k[3], (attention_location_n_filters, 2,
                                   attention_location_kernel_size), 1.0)
    w_dense = xavier_uniform(k[4], (attention_dim, attention_location_n_filters), tanh_gain)

    query = jax.random.normal(k[5], (B, attention_rnn_dim), jnp.float32)
    memory = jax.random.normal(k[6], (B, T, embedding_dim), jnp.float32)
    # forward() receives processed_memory precomputed by memory_layer (glue, not hot path)
    processed_memory = jnp.einsum('bte,de->btd', memory, w_memory)

    prev_w = jax.nn.softmax(jax.random.normal(k[7], (B, T), jnp.float32), axis=1)
    cum_w = jnp.cumsum(prev_w, axis=1)
    attention_weights_cat = jnp.stack([prev_w, cum_w], axis=1)              # (B, 2, T)

    lengths = jnp.array([T, T - 5], jnp.int32)
    mask = jnp.arange(T)[None, :] >= lengths[:, None]                       # (B, T) bool

    fwd = jax.jit(attention_forward, static_argnames=("block_b",))
    ctx, attw = fwd(query, attention_weights_cat, processed_memory,
                    memory, mask, w_query, w_conv, w_dense, w_v)
    ctx = jax.block_until_ready(ctx)
    attw = jax.block_until_ready(attw)

    ctx_ref, attw_ref = attention_reference(query, attention_weights_cat, processed_memory,
                                            memory, mask, w_query, w_conv, w_dense, w_v)
    # slightly loose tolerance: approx EUP reciprocal in the softmax normalization
    np.testing.assert_allclose(np.asarray(attw), np.asarray(attw_ref), rtol=2e-3, atol=2e-3)
    np.testing.assert_allclose(np.asarray(ctx), np.asarray(ctx_ref), rtol=2e-3, atol=2e-3)

    print("KERNEL_OK")
</pallas_src>

<mosaic_0001>
module attributes {stable_mosaic.version = 11 : i64} {
  func.func @attention_kernel(%arg0: i32, %arg1: memref<1x1x32xf32, #tpu.memory_space<vmem>>, %arg2: memref<1x16x10xf32, #tpu.memory_space<vmem>>, %arg3: memref<1x16x32xf32, #tpu.memory_space<vmem>>, %arg4: memref<1x16x32xf32, #tpu.memory_space<vmem>>, %arg5: memref<1x1x16xf32, #tpu.memory_space<vmem>>, %arg6: memref<32x32xf32, #tpu.memory_space<vmem>>, %arg7: memref<10x32xf32, #tpu.memory_space<vmem>>, %arg8: memref<1x32xf32, #tpu.memory_space<vmem>>, %arg9: memref<1x1x32xf32, #tpu.memory_space<vmem>>, %arg10: memref<1x1x16xf32, #tpu.memory_space<vmem>>) attributes {dimension_semantics = [#tpu.dimension_semantics<parallel>], iteration_bounds = array<i64: 2>, scalar_prefetch = 0 : i64, scratch_operands = 0 : i64, tpu.core_type = #tpu.core_type<tc>, window_params = [{transform_indices = @transform_0, window_bounds = array<i64: 1, 1, 32>}, {transform_indices = @transform_1, window_bounds = array<i64: 1, 16, 10>}, {transform_indices = @transform_2, window_bounds = array<i64: 1, 16, 32>}, {transform_indices = @transform_3, window_bounds = array<i64: 1, 16, 32>}, {transform_indices = @transform_4, window_bounds = array<i64: 1, 1, 16>}, {pipeline_mode = #tpu.pipeline_mode<synchronous>, transform_indices = @transform_5, window_bounds = array<i64: 32, 32>}, {pipeline_mode = #tpu.pipeline_mode<synchronous>, transform_indices = @transform_6, window_bounds = array<i64: 10, 32>}, {pipeline_mode = #tpu.pipeline_mode<synchronous>, transform_indices = @transform_7, window_bounds = array<i64: 1, 32>}, {transform_indices = @transform_8, window_bounds = array<i64: 1, 1, 32>}, {transform_indices = @transform_9, window_bounds = array<i64: 1, 1, 16>}]} {
    %c0 = arith.constant 0 : index
    %c0_0 = arith.constant 0 : index
    %0 = vector.load %arg6[%c0, %c0_0] : memref<32x32xf32, #tpu.memory_space<vmem>>, vector<32x32xf32>
    %1 = vector.shape_cast %0 : vector<32x32xf32> to vector<1x32x32xf32>
    %c0_1 = arith.constant 0 : index
    %c0_2 = arith.constant 0 : index
    %2 = vector.load %arg7[%c0_1, %c0_2] : memref<10x32xf32, #tpu.memory_space<vmem>>, vector<10x32xf32>
    %3 = vector.shape_cast %2 : vector<10x32xf32> to vector<1x10x32xf32>
    %c0_3 = arith.constant 0 : index
    %c0_4 = arith.constant 0 : index
    %4 = vector.load %arg8[%c0_3, %c0_4] : memref<1x32xf32, #tpu.memory_space<vmem>>, vector<1x32xf32>
    %5 = vector.shape_cast %4 : vector<1x32xf32> to vector<1x1x32xf32>
    %c0_5 = arith.constant 0 : index
    %c0_6 = arith.constant 0 : index
    %c0_7 = arith.constant 0 : index
    %6 = vector.load %arg1[%c0_5, %c0_6, %c0_7] : memref<1x1x32xf32, #tpu.memory_space<vmem>>, vector<1x1x32xf32>
    "tpu.trace_start"() <{level = 10 : i32, message = "bqr,brd->bqd"}> : () -> ()
    %cst = arith.constant dense<0.000000e+00> : vector<1x1x32xf32>
    %7 = tpu.matmul %6, %1, %cst {dimension_numbers = #tpu.dot_dimension_numbers<[2], [1], [1], [2], [0, 0, 0, 1, 1, 2], [0], [0]>} : vector<1x1x32xf32>, vector<1x32x32xf32>, vector<1x1x32xf32> -> vector<1x1x32xf32>
    "tpu.trace_stop"() : () -> ()
    %c0_8 = arith.constant 0 : index
    %c0_9 = arith.constant 0 : index
    %c0_10 = arith.constant 0 : index
    %8 = vector.load %arg2[%c0_8, %c0_9, %c0_10] : memref<1x16x10xf32, #tpu.memory_space<vmem>>, vector<1x16x10xf32>
    "tpu.trace_start"() <{level = 10 : i32, message = "btk,bkd->btd"}> : () -> ()
    %cst_11 = arith.constant dense<0.000000e+00> : vector<1x16x32xf32>
    %9 = tpu.matmul %8, %3, %cst_11 {dimension_numbers = #tpu.dot_dimension_numbers<[2], [1], [1], [2], [0, 0, 0, 1, 1, 2], [0], [0]>} : vector<1x16x10xf32>, vector<1x10x32xf32>, vector<1x16x32xf32> -> vector<1x16x32xf32>
    "tpu.trace_stop"() : () -> ()
    %10 = vector.broadcast %7 : vector<1x1x32xf32> to vector<1x16x32xf32>
    %11 = arith.addf %10, %9 : vector<1x16x32xf32>
    %c0_12 = arith.constant 0 : index
    %c0_13 = arith.constant 0 : index
    %c0_14 = arith.constant 0 : index
    %12 = vector.load %arg3[%c0_12, %c0_13, %c0_14] : memref<1x16x32xf32, #tpu.memory_space<vmem>>, vector<1x16x32xf32>
    %13 = arith.addf %11, %12 : vector<1x16x32xf32>
    %14 = math.tanh %13 : vector<1x16x32xf32>
    "tpu.trace_start"() <{level = 10 : i32, message = "bqd,btd->bqt"}> : () -> ()
    %cst_15 = arith.constant dense<0.000000e+00> : vector<1x1x16xf32>
    %15 = tpu.matmul %5, %14, %cst_15 {dimension_numbers = #tpu.dot_dimension_numbers<[2], [2], [1], [1], [0, 0, 0, 1, 1, 1], [0], [0]>} : vector<1x1x32xf32>, vector<1x16x32xf32>, vector<1x1x16xf32> -> vector<1x1x16xf32>
    "tpu.trace_stop"() : () -> ()
    %c0_16 = arith.constant 0 : index
    %c0_17 = arith.constant 0 : index
    %c0_18 = arith.constant 0 : index
    %16 = vector.load %arg5[%c0_16, %c0_17, %c0_18] : memref<1x1x16xf32, #tpu.memory_space<vmem>>, vector<1x1x16xf32>
    %17 = arith.addf %15, %16 : vector<1x1x16xf32>
    %cst_19 = arith.constant dense<0xFF800000> : vector<1x1xf32>
    %18 = vector.multi_reduction <maximumf>, %17, %cst_19 [2] : vector<1x1x16xf32> to vector<1x1xf32>
    %19 = vector.shape_cast %18 : vector<1x1xf32> to vector<1x1x1xf32>
    %20 = vector.broadcast %19 : vector<1x1x1xf32> to vector<1x1x16xf32>
    %21 = arith.subf %17, %20 : vector<1x1x16xf32>
    %22 = math.exp %21 : vector<1x1x16xf32>
    %cst_20 = arith.constant dense<0.000000e+00> : vector<1x1xf32>
    %23 = vector.multi_reduction <add>, %22, %cst_20 [2] : vector<1x1x16xf32> to vector<1x1xf32>
    %24 = vector.shape_cast %23 : vector<1x1xf32> to vector<1x1x1xf32>
    %25 = tpu.reciprocal %24 {approx = true} : vector<1x1x1xf32> -> vector<1x1x1xf32>
    %26 = vector.broadcast %25 : vector<1x1x1xf32> to vector<1x1x16xf32>
    %27 = arith.mulf %22, %26 : vector<1x1x16xf32>
    %c0_21 = arith.constant 0 : index
    %c0_22 = arith.constant 0 : index
    %c0_23 = arith.constant 0 : index
    %28 = vector.load %arg4[%c0_21, %c0_22, %c0_23] : memref<1x16x32xf32, #tpu.memory_space<vmem>>, vector<1x16x32xf32>
    "tpu.trace_start"() <{level = 10 : i32, message = "bqt,bte->bqe"}> : () -> ()
    %cst_24 = arith.constant dense<0.000000e+00> : vector<1x1x32xf32>
    %29 = tpu.matmul %27, %28, %cst_24 {dimension_numbers = #tpu.dot_dimension_numbers<[2], [1], [1], [2], [0, 0, 0, 1, 1, 2], [0], [0]>} : vector<1x1x16xf32>, vector<1x16x32xf32>, vector<1x1x32xf32> -> vector<1x1x32xf32>
    "tpu.trace_stop"() : () -> ()
    %c0_25 = arith.constant 0 : index
    %c0_26 = arith.constant 0 : index
    %c0_27 = arith.constant 0 : index
    %30 = vector.load %arg10[%c0_25, %c0_26, %c0_27] : memref<1x1x16xf32, #tpu.memory_space<vmem>>, vector<1x1x16xf32>
    tpu.vector_store %arg10[%c0_25, %c0_26, %c0_27], %27 {strides = array<i32>} : memref<1x1x16xf32, #tpu.memory_space<vmem>>, vector<1x1x16xf32>,
    %c0_28 = arith.constant 0 : index
    %c0_29 = arith.constant 0 : index
    %c0_30 = arith.constant 0 : index
    %31 = vector.load %arg9[%c0_28, %c0_29, %c0_30] : memref<1x1x32xf32, #tpu.memory_space<vmem>>, vector<1x1x32xf32>
    tpu.vector_store %arg9[%c0_28, %c0_29, %c0_30], %29 {strides = array<i32>} : memref<1x1x32xf32, #tpu.memory_space<vmem>>, vector<1x1x32xf32>,
    return
  }
  func.func @transform_0(%arg0: i32) -> (i32, i32, i32) {
    %c0_i32 = arith.constant 0 : i32
    %c0_i32_0 = arith.constant 0 : i32
    %c0_i32_1 = arith.constant 0 : i32
    return %arg0, %c0_i32, %c0_i32_0 : i32, i32, i32
  }
  func.func @transform_1(%arg0: i32) -> (i32, i32, i32) {
    %c0_i32 = arith.constant 0 : i32
    %c0_i32_0 = arith.constant 0 : i32
    %c0_i32_1 = arith.constant 0 : i32
    return %arg0, %c0_i32, %c0_i32_0 : i32, i32, i32
  }
  func.func @transform_2(%arg0: i32) -> (i32, i32, i32) {
    %c0_i32 = arith.constant 0 : i32
    %c0_i32_0 = arith.constant 0 : i32
    %c0_i32_1 = arith.constant 0 : i32
    return %arg0, %c0_i32, %c0_i32_0 : i32, i32, i32
  }
  func.func @transform_3(%arg0: i32) -> (i32, i32, i32) {
    %c0_i32 = arith.constant 0 : i32
    %c0_i32_0 = arith.constant 0 : i32
    %c0_i32_1 = arith.constant 0 : i32
    return %arg0, %c0_i32, %c0_i32_0 : i32, i32, i32
  }
  func.func @transform_4(%arg0: i32) -> (i32, i32, i32) {
    %c0_i32 = arith.constant 0 : i32
    %c0_i32_0 = arith.constant 0 : i32
    %c0_i32_1 = arith.constant 0 : i32
    return %arg0, %c0_i32, %c0_i32_0 : i32, i32, i32
  }
  func.func @transform_5(%arg0: i32) -> (i32, i32) {
    %c0_i32 = arith.constant 0 : i32
    %c0_i32_0 = arith.constant 0 : i32
    %c0_i32_1 = arith.constant 0 : i32
    return %c0_i32, %c0_i32_0 : i32, i32
  }
  func.func @transform_6(%arg0: i32) -> (i32, i32) {
    %c0_i32 = arith.constant 0 : i32
    %c0_i32_0 = arith.constant 0 : i32
    %c0_i32_1 = arith.constant 0 : i32
    return %c0_i32, %c0_i32_0 : i32, i32
  }
  func.func @transform_7(%arg0: i32) -> (i32, i32) {
    %c0_i32 = arith.constant 0 : i32
    %c0_i32_0 = arith.constant 0 : i32
    %c0_i32_1 = arith.constant 0 : i32
    return %c0_i32, %c0_i32_0 : i32, i32
  }
  func.func @transform_8(%arg0: i32) -> (i32, i32, i32) {
    %c0_i32 = arith.constant 0 : i32
    %c0_i32_0 = arith.constant 0 : i32
    %c0_i32_1 = arith.constant 0 : i32
    return %arg0, %c0_i32, %c0_i32_0 : i32, i32, i32
  }
  func.func @transform_9(%arg0: i32) -> (i32, i32, i32) {
    %c0_i32 = arith.constant 0 : i32
    %c0_i32_0 = arith.constant 0 : i32
    %c0_i32_1 = arith.constant 0 : i32
    return %arg0, %c0_i32, %c0_i32_0 : i32, i32, i32
  }
}

</mosaic_0001>

<llo_original>
// kernel: attention_forward.1
$region0: #{attention_forward.1}
  #allocation0 [shape = 'u32[]', space=smem, size = 0x4, offset = 0x4, fixed_abs, tag = 'smem constant byte address 0x4 - core index']
  #allocation1 [shape = 'u32[72,128]{1,0:T(1,128)}', space=vmem, size = 0x9000, scoped, tag = 'internal scratch']
  %s0 = inlined_call_operand.vmem [shape: f32[2,1,32], index: 0, kind: input, shape index: {}]
  %s1 = inlined_call_operand.vmem [shape: f32[2,16,10], index: 1, kind: input, shape index: {}]
  %s2 = inlined_call_operand.vmem [shape: f32[2,16,32], index: 2, kind: input, shape index: {}]
  %s3 = inlined_call_operand.vmem [shape: f32[2,16,32], index: 3, kind: input, shape index: {}]
  %s4 = inlined_call_operand.vmem [shape: f32[2,1,16], index: 4, kind: input, shape index: {}]
  %s5 = inlined_call_operand.vmem [shape: f32[32,32], index: 5, kind: input, shape index: {}]
  %s6 = inlined_call_operand.vmem [shape: f32[10,32], index: 6, kind: input, shape index: {}]
  %s7 = inlined_call_operand.vmem [shape: f32[1,32], index: 7, kind: input, shape index: {}]
  %s8 = inlined_call_operand.hbm [shape: f32[2,1,32], index: 8, kind: output, shape index: {0}]
  %s9 = inlined_call_operand.hbm [shape: f32[2,1,16], index: 9, kind: output, shape index: {1}]
  %10 = xla_tuple %s8, %s9
  %s11 = sld [smem:[#allocation0]]
  $region73: #{attention_forward.1} parent=0
    _
  %s13 = ssub.s32 1, %s11
  %s14 = scalar_select 0, %s13, %s11
  $region1: #{attention_forward.1} parent=0
    #allocation2 [shape = 'u8[1024]{0}', space=vmem, size = 0x400, scoped, tag = 'output window, operand 0']
    #allocation3 [shape = 's32[2]{0}', space=sflag, size = 0x8, scoped, tag = 'scoped memory for attention_forward.1']
    #allocation4 [shape = 'u8[1024]{0}', space=vmem, size = 0x400, scoped, tag = 'output window, operand 1']
    #allocation5 [shape = 's32[2]{0}', space=sflag, size = 0x8, scoped, tag = 'scoped memory for attention_forward.1']
    %15 = vsyncpa [#allocation3], 0
    %s16 = scalar_lea.sflag [#allocation3], 1
    %17 = vsyncpa %s16, 0
    %18 = vsyncpa [#allocation5], 0
    %s19 = scalar_lea.sflag [#allocation5], 1
    %20 = vsyncpa %s19, 0
    loop: start=0, step=1, limit=4
    $region2: #{attention_forward.1} parent=1 // loop_pre_header
      _
    $region3: #{attention_forward.1} parent=1 // loop_header
      %s22 = sphi 0, %s26
      %p23 = scmp.ge.s32.totalorder %s22, 4
      %s32 = sphi 0, %s34
      %s35 = sphi 0, %s32
      %s36 = sphi 0, %s35
      %s52 = sphi 0, %s36
      %s58 = sphi 0, %s60
      %s61 = sphi 0, %s58
      %s62 = sphi 0, %s61
      %s78 = sphi 0, %s62
      %s84 = sphi 0, %s86
      %s87 = sphi 0, %s84
      %s88 = sphi 0, %s87
      %s104 = sphi 0, %s88
      %s110 = sphi 0, %s112
      %s113 = sphi 0, %s110
      %s114 = sphi 0, %s113
      %s130 = sphi 0, %s114
      %s136 = sphi 0, %s138
      %s139 = sphi 0, %s136
      %s140 = sphi 0, %s139
      %s156 = sphi 0, %s140
      %s160 = sphi 0, %s160
      %s162 = sphi 0, %s160
      %s163 = sphi 0, %s162
      %s177 = sphi 0, %s163
      %s181 = sphi 0, %s181
      %s183 = sphi 0, %s181
      %s184 = sphi 0, %s183
      %s198 = sphi 0, %s184
      %s202 = sphi 0, %s202
      %s204 = sphi 0, %s202
      %s205 = sphi 0, %s204
      %s219 = sphi 0, %s205
      %s225 = sphi 0, %s227
      %s228 = sphi 0, %s225
      %s229 = sphi 0, %s228
      %s245 = sphi 0, %s229
      %s251 = sphi 0, %s253
      %s254 = sphi 0, %s251
      %s255 = sphi 0, %s254
      %s271 = sphi 0, %s255
    $region4: #{attention_forward.1} parent=1 // loop_header_branch
      %25 = sbr.rel (%p23) target = $region8
    $region5: #{attention_forward.1} parent=1 // loop_body
      %s27 = ssub.s32 %s22, 1
      %s28 = ssub.s32 %s22, 2
      %s29 = sadd.s32 %s22, 1
      %s30 = ssub.s32 %s22, %s29
      %p31 = scmp.eq.s32.totalorder %s30, 0
      %s33 = sadd.s32 %s32, 1
      %s34 = scalar_select %p31, %s32, %s33
      %p37 = pneg %p31
      %p38 = scmp.eq.s32.totalorder %s22, 1
      %p39 = por %p37, %p38
      %p40 = scmp.ne.s32.totalorder %s32, %s35
      %p41 = scmp.eq.s32.totalorder %s22, 0
      %p42 = por %p40, %p41
      %p43 = scmp.ne.s32.totalorder %s32, %s35
      %p44 = scmp.eq.s32.totalorder %s27, 1
      %p45 = por %p43, %p44
      %p46 = scmp.ne.s32.totalorder %s35, %s36
      %p47 = scmp.eq.s32.totalorder %s27, 0
      %p48 = por %p46, %p47
      %p49 = scmp.ne.s32.totalorder %s35, %s36
      %p50 = scmp.eq.s32.totalorder %s28, 1
      %p51 = por %p49, %p50
      %p53 = scmp.ne.s32.totalorder %s36, %s52
      %p54 = scmp.eq.s32.totalorder %s28, 0
      %p55 = por %p53, %p54
      %s56 = ssub.s32 %s22, %s29
      %p57 = scmp.eq.s32.totalorder %s56, 0
      %s59 = sadd.s32 %s58, 1
      %s60 = scalar_select %p57, %s58, %s59
      %p63 = pneg %p57
      %p64 = scmp.eq.s32.totalorder %s22, 1
      %p65 = por %p63, %p64
      %p66 = scmp.ne.s32.totalorder %s58, %s61
      %p67 = scmp.eq.s32.totalorder %s22, 0
      %p68 = por %p66, %p67
      %p69 = scmp.ne.s32.totalorder %s58, %s61
      %p70 = scmp.eq.s32.totalorder %s27, 1
      %p71 = por %p69, %p70
      %p72 = scmp.ne.s32.totalorder %s61, %s62
      %p73 = scmp.eq.s32.totalorder %s27, 0
      %p74 = por %p72, %p73
      %p75 = scmp.ne.s32.totalorder %s61, %s62
      %p76 = scmp.eq.s32.totalorder %s28, 1
      %p77 = por %p75, %p76
      %p79 = scmp.ne.s32.totalorder %s62, %s78
      %p80 = scmp.eq.s32.totalorder %s28, 0
      %p81 = por %p79, %p80
      %s82 = ssub.s32 %s22, %s29
      %p83 = scmp.eq.s32.totalorder %s82, 0
      %s85 = sadd.s32 %s84, 1
      %s86 = scalar_select %p83, %s84, %s85
      %p89 = pneg %p83
      %p90 = scmp.eq.s32.totalorder %s22, 1
      %p91 = por %p89, %p90
      %p92 = scmp.ne.s32.totalorder %s84, %s87
      %p93 = scmp.eq.s32.totalorder %s22, 0
      %p94 = por %p92, %p93
      %p95 = scmp.ne.s32.totalorder %s84, %s87
      %p96 = scmp.eq.s32.totalorder %s27, 1
      %p97 = por %p95, %p96
      %p98 = scmp.ne.s32.totalorder %s87, %s88
      %p99 = scmp.eq.s32.totalorder %s27, 0
      %p100 = por %p98, %p99
      %p101 = scmp.ne.s32.totalorder %s87, %s88
      %p102 = scmp.eq.s32.totalorder %s28, 1
      %p103 = por %p101, %p102
      %p105 = scmp.ne.s32.totalorder %s88, %s104
      %p106 = scmp.eq.s32.totalorder %s28, 0
      %p107 = por %p105, %p106
      %s108 = ssub.s32 %s22, %s29
      %p109 = scmp.eq.s32.totalorder %s108, 0
      %s111 = sadd.s32 %s110, 1
      %s112 = scalar_select %p109, %s110, %s111
      %p115 = pneg %p109
      %p116 = scmp.eq.s32.totalorder %s22, 1
      %p117 = por %p115, %p116
      %p118 = scmp.ne.s32.totalorder %s110, %s113
      %p119 = scmp.eq.s32.totalorder %s22, 0
      %p120 = por %p118, %p119
      %p121 = scmp.ne.s32.totalorder %s110, %s113
      %p122 = scmp.eq.s32.totalorder %s27, 1
      %p123 = por %p121, %p122
      %p124 = scmp.ne.s32.totalorder %s113, %s114
      %p125 = scmp.eq.s32.totalorder %s27, 0
      %p126 = por %p124, %p125
      %p127 = scmp.ne.s32.totalorder %s113, %s114
      %p128 = scmp.eq.s32.totalorder %s28, 1
      %p129 = por %p127, %p128
      %p131 = scmp.ne.s32.totalorder %s114, %s130
      %p132 = scmp.eq.s32.totalorder %s28, 0
      %p133 = por %p131, %p132
      %s134 = ssub.s32 %s22, %s29
      %p135 = scmp.eq.s32.totalorder %s134, 0
      %s137 = sadd.s32 %s136, 1
      %s138 = scalar_select %p135, %s136, %s137
      %p141 = pneg %p135
      %p142 = scmp.eq.s32.totalorder %s22, 1
      %p143 = por %p141, %p142
      %p144 = scmp.ne.s32.totalorder %s136, %s139
      %p145 = scmp.eq.s32.totalorder %s22, 0
      %p146 = por %p144, %p145
      %p147 = scmp.ne.s32.totalorder %s136, %s139
      %p148 = scmp.eq.s32.totalorder %s27, 1
      %p149 = por %p147, %p148
      %p150 = scmp.ne.s32.totalorder %s139, %s140
      %p151 = scmp.eq.s32.totalorder %s27, 0
      %p152 = por %p150, %p151
      %p153 = scmp.ne.s32.totalorder %s139, %s140
      %p154 = scmp.eq.s32.totalorder %s28, 1
      %p155 = por %p153, %p154
      %p157 = scmp.ne.s32.totalorder %s140, %s156
      %p158 = scmp.eq.s32.totalorder %s28, 0
      %p159 = por %p157, %p158
      %s161 = sadd.s32 %s160, 1
      %p164 = scmp.eq.s32.totalorder %s22, 1
      %p165 = scmp.ne.s32.totalorder %s160, %s162
      %p166 = scmp.eq.s32.totalorder %s22, 0
      %p167 = por %p165, %p166
      %p168 = scmp.ne.s32.totalorder %s160, %s162
      %p169 = scmp.eq.s32.totalorder %s27, 1
      %p170 = por %p168, %p169
      %p171 = scmp.ne.s32.totalorder %s162, %s163
      %p172 = scmp.eq.s32.totalorder %s27, 0
      %p173 = por %p171, %p172
      %p174 = scmp.ne.s32.totalorder %s162, %s163
      %p175 = scmp.eq.s32.totalorder %s28, 1
      %p176 = por %p174, %p175
      %p178 = scmp.ne.s32.totalorder %s163, %s177
      %p179 = scmp.eq.s32.totalorder %s28, 0
      %p180 = por %p178, %p179
      %s182 = sadd.s32 %s181, 1
      %p185 = scmp.eq.s32.totalorder %s22, 1
      %p186 = scmp.ne.s32.totalorder %s181, %s183
      %p187 = scmp.eq.s32.totalorder %s22, 0
      %p188 = por %p186, %p187
      %p189 = scmp.ne.s32.totalorder %s181, %s183
      %p190 = scmp.eq.s32.totalorder %s27, 1
      %p191 = por %p189, %p190
      %p192 = scmp.ne.s32.totalorder %s183, %s184
      %p193 = scmp.eq.s32.totalorder %s27, 0
      %p194 = por %p192, %p193
      %p195 = scmp.ne.s32.totalorder %s183, %s184
      %p196 = scmp.eq.s32.totalorder %s28, 1
      %p197 = por %p195, %p196
      %p199 = scmp.ne.s32.totalorder %s184, %s198
      %p200 = scmp.eq.s32.totalorder %s28, 0
      %p201 = por %p199, %p200
      %s203 = sadd.s32 %s202, 1
      %p206 = scmp.eq.s32.totalorder %s22, 1
      %p207 = scmp.ne.s32.totalorder %s202, %s204
      %p208 = scmp.eq.s32.totalorder %s22, 0
      %p209 = por %p207, %p208
      %p210 = scmp.ne.s32.totalorder %s202, %s204
      %p211 = scmp.eq.s32.totalorder %s27, 1
      %p212 = por %p210, %p211
      %p213 = scmp.ne.s32.totalorder %s204, %s205
      %p214 = scmp.eq.s32.totalorder %s27, 0
      %p215 = por %p213, %p214
      %p216 = scmp.ne.s32.totalorder %s204, %s205
      %p217 = scmp.eq.s32.totalorder %s28, 1
      %p218 = por %p216, %p217
      %p220 = scmp.ne.s32.totalorder %s205, %s219
      %p221 = scmp.eq.s32.totalorder %s28, 0
      %p222 = por %p220, %p221
      %s223 = ssub.s32 %s22, %s29
      %p224 = scmp.eq.s32.totalorder %s223, 0
      %s226 = sadd.s32 %s225, 1
      %s227 = scalar_select %p224, %s225, %s226
      %p230 = pneg %p224
      %p231 = scmp.eq.s32.totalorder %s22, 1
      %p232 = por %p230, %p231
      %p233 = scmp.ne.s32.totalorder %s225, %s228
      %p234 = scmp.eq.s32.totalorder %s22, 0
      %p235 = por %p233, %p234
      %p236 = scmp.ne.s32.totalorder %s225, %s228
      %p237 = scmp.eq.s32.totalorder %s27, 1
      %p238 = por %p236, %p237
      %p239 = scmp.ne.s32.totalorder %s228, %s229
      %p240 = scmp.eq.s32.totalorder %s27, 0
      %p241 = por %p239, %p240
      %p242 = scmp.ne.s32.totalorder %s228, %s229
      %p243 = scmp.eq.s32.totalorder %s28, 1
      %p244 = por %p242, %p243
      %p246 = scmp.ne.s32.totalorder %s229, %s245
      %p247 = scmp.eq.s32.totalorder %s28, 0
      %p248 = por %p246, %p247
      %s249 = ssub.s32 %s22, %s29
      %p250 = scmp.eq.s32.totalorder %s249, 0
      %s252 = sadd.s32 %s251, 1
      %s253 = scalar_select %p250, %s251, %s252
      %p256 = pneg %p250
      %p257 = scmp.eq.s32.totalorder %s22, 1
      %p258 = por %p256, %p257
      %p259 = scmp.ne.s32.totalorder %s251, %s254
      %p260 = scmp.eq.s32.totalorder %s22, 0
      %p261 = por %p259, %p260
      %p262 = scmp.ne.s32.totalorder %s251, %s254
      %p263 = scmp.eq.s32.totalorder %s27, 1
      %p264 = por %p262, %p263
      %p265 = scmp.ne.s32.totalorder %s254, %s255
      %p266 = scmp.eq.s32.totalorder %s27, 0
      %p267 = por %p265, %p266
      %p268 = scmp.ne.s32.totalorder %s254, %s255
      %p269 = scmp.eq.s32.totalorder %s28, 1
      %p270 = por %p268, %p269
      %p272 = scmp.ne.s32.totalorder %s255, %s271
      %p273 = scmp.eq.s32.totalorder %s28, 0
      %p274 = por %p272, %p273
      %p275 = scmp.le.s32.totalorder 1, %s22
      %p276 = scmp.lt.s32.totalorder %s22, 3
      %p277 = pnand %p275, %p276
      %p278 = pneg %p277
      // Predicated region
      $region9: #{attention_forward.1} parent=5 // pred_check
        _
      $region10: #{attention_forward.1} parent=5 // pred_check_branch
        %280 = sbr.rel (%p277) target = $region12
      $region11: #{attention_forward.1} parent=5 // pred_region
        %s281 = ssub.s32 %s22, 1
        // Predicated region
        $region13: #{attention_forward.1} parent=11 // pred_check
          %p282 = pneg %p173
        $region14: #{attention_forward.1} parent=11 // pred_check_branch
          %284 = sbr.rel (%p282) target = $region16
        $region15: #{attention_forward.1} parent=11 // pred_region
          _
        $region16: #{attention_forward.1} parent=11 // pred_fallthru
          _
        // Predicated region
        $region17: #{attention_forward.1} parent=11 // pred_check
          %p285 = pneg %p194
        $region18: #{attention_forward.1} parent=11 // pred_check_branch
          %287 = sbr.rel (%p285) target = $region20
        $region19: #{attention_forward.1} parent=11 // pred_region
          _
        $region20: #{attention_forward.1} parent=11 // pred_fallthru
          _
        // Predicated region
        $region21: #{attention_forward.1} parent=11 // pred_check
          %p288 = pneg %p215
        $region22: #{attention_forward.1} parent=11 // pred_check_branch
          %290 = sbr.rel (%p288) target = $region24
        $region23: #{attention_forward.1} parent=11 // pred_region
          _
        $region24: #{attention_forward.1} parent=11 // pred_fallthru
          _
      $region12: #{attention_forward.1} parent=5 // pred_fallthru
        _
      %p291 = scmp.lt.s32.totalorder %s22, 2
      // Predicated region
      $region25: #{attention_forward.1} parent=5 // pred_check
        %p292 = pneg %p291
      $region26: #{attention_forward.1} parent=5 // pred_check_branch
        %294 = sbr.rel (%p292) target = $region28
      $region27: #{attention_forward.1} parent=5 // pred_region
        // Predicated region
        $region29: #{attention_forward.1} parent=27 // pred_check
          %p295 = pneg %p42
        $region30: #{attention_forward.1} parent=27 // pred_check_branch
          %297 = sbr.rel (%p295) target = $region32
        $region31: #{attention_forward.1} parent=27 // pred_region
          %p298 = scmp.lt.s32.totalorder %s22, 1
          %s299 = scalar_select %p298, %s22, 1
          %s300 = scalar_lea.vmem %s0, %s299
        $region32: #{attention_forward.1} parent=27 // pred_fallthru
          _
        // Predicated region
        $region33: #{attention_forward.1} parent=27 // pred_check
          %p301 = pneg %p68
        $region34: #{attention_forward.1} parent=27 // pred_check_branch
          %303 = sbr.rel (%p301) target = $region36
        $region35: #{attention_forward.1} parent=27 // pred_region
          %p304 = scmp.lt.s32.totalorder %s22, 1
          %s305 = scalar_select %p304, %s22, 1
          %s306 = smul.addr %s305, 2
          %s307 = smul.addr %s306, 8
          %s308 = scalar_lea.vmem %s1, %s307
        $region36: #{attention_forward.1} parent=27 // pred_fallthru
          _
        // Predicated region
        $region37: #{attention_forward.1} parent=27 // pred_check
          %p309 = pneg %p94
        $region38: #{attention_forward.1} parent=27 // pred_check_branch
          %311 = sbr.rel (%p309) target = $region40
        $region39: #{attention_forward.1} parent=27 // pred_region
          %p312 = scmp.lt.s32.totalorder %s22, 1
          %s313 = scalar_select %p312, %s22, 1
          %s314 = smul.addr %s313, 2
          %s315 = smul.addr %s314, 8
          %s316 = scalar_lea.vmem %s2, %s315
        $region40: #{attention_forward.1} parent=27 // pred_fallthru
          _
        // Predicated region
        $region41: #{attention_forward.1} parent=27 // pred_check
          %p317 = pneg %p120
        $region42: #{attention_forward.1} parent=27 // pred_check_branch
          %319 = sbr.rel (%p317) target = $region44
        $region43: #{attention_forward.1} parent=27 // pred_region
          %p320 = scmp.lt.s32.totalorder %s22, 1
          %s321 = scalar_select %p320, %s22, 1
          %s322 = smul.addr %s321, 2
          %s323 = smul.addr %s322, 8
          %s324 = scalar_lea.vmem %s3, %s323
        $region44: #{attention_forward.1} parent=27 // pred_fallthru
          _
        // Predicated region
        $region45: #{attention_forward.1} parent=27 // pred_check
          %p325 = pneg %p146
        $region46: #{attention_forward.1} parent=27 // pred_check_branch
          %327 = sbr.rel (%p325) target = $region48
        $region47: #{attention_forward.1} parent=27 // pred_region
          %p328 = scmp.lt.s32.totalorder %s22, 1
          %s329 = scalar_select %p328, %s22, 1
          %s330 = scalar_lea.vmem %s4, %s329
        $region48: #{attention_forward.1} parent=27 // pred_fallthru
          _
      $region28: #{attention_forward.1} parent=5 // pred_fallthru
        _
      %p331 = scmp.le.s32.totalorder 1, %s22
      %p332 = scmp.lt.s32.totalorder %s22, 3
      %p333 = pnand %p331, %p332
      %p334 = pneg %p333
      // Predicated region
      $region49: #{attention_forward.1} parent=5 // pred_check
        _
      $region50: #{attention_forward.1} parent=5 // pred_check_branch
        %336 = sbr.rel (%p333) target = $region52
      $region51: #{attention_forward.1} parent=5 // pred_region
        %s337 = ssub.s32 %s22, 1
        %p338 = scmp.lt.s32.totalorder %s27, 1
        %s339 = scalar_select %p338, %s27, 1
        %s340 = scalar_lea.vmem %s0, %s339
        %p341 = pneg %p48
        %p342 = pneg %p45
        %p343 = scmp.lt.s32.totalorder %s27, 1
        %s344 = scalar_select %p343, %s27, 1
        %s345 = smul.addr %s344, 2
        %s346 = smul.addr %s345, 8
        %s347 = scalar_lea.vmem %s1, %s346
        %p348 = pneg %p74
        %p349 = pneg %p71
        %p350 = scmp.lt.s32.totalorder %s27, 1
        %s351 = scalar_select %p350, %s27, 1
        %s352 = smul.addr %s351, 2
        %s353 = smul.addr %s352, 8
        %s354 = scalar_lea.vmem %s2, %s353
        %p355 = pneg %p100
        %p356 = pneg %p97
        %p357 = scmp.lt.s32.totalorder %s27, 1
        %s358 = scalar_select %p357, %s27, 1
        %s359 = smul.addr %s358, 2
        %s360 = smul.addr %s359, 8
        %s361 = scalar_lea.vmem %s3, %s360
        %p362 = pneg %p126
        %p363 = pneg %p123
        %p364 = scmp.lt.s32.totalorder %s27, 1
        %s365 = scalar_select %p364, %s27, 1
        %s366 = scalar_lea.vmem %s4, %s365
        %p367 = pneg %p152
        %p368 = pneg %p149
        %p369 = pneg %p173
        %p370 = pneg %p170
        %p371 = pneg %p194
        %p372 = pneg %p191
        %p373 = pneg %p215
        %p374 = pneg %p212
        %p375 = pneg %p241
        %p376 = pneg %p238
        %s377 = sand.u32 %s228, 1
        %s378 = scalar_lea.sflag [#allocation3], %s377
        %s379 = sand.u32 %s228, 1
        %s380 = scalar_lea.vmem [#allocation2], %s379
        %p381 = pneg %p267
        %p382 = pneg %p264
        %s383 = sand.u32 %s254, 1
        %s384 = scalar_lea.sflag [#allocation5], %s383
        %s385 = sand.u32 %s254, 1
        %s386 = scalar_lea.vmem [#allocation4], %s385
        %p387 = scmp.lt.s32.totalorder %s27, 1
        %s388 = scalar_select %p387, %s27, 1
        %s389 = scalar_lea.vmem %s0, %s388
        %p390 = scmp.lt.s32.totalorder %s27, 1
        %s391 = scalar_select %p390, %s27, 1
        %s392 = smul.addr %s391, 2
        %s393 = smul.addr %s392, 8
        %s394 = scalar_lea.vmem %s1, %s393
        %p395 = scmp.lt.s32.totalorder %s27, 1
        %s396 = scalar_select %p395, %s27, 1
        %s397 = smul.addr %s396, 2
        %s398 = smul.addr %s397, 8
        %s399 = scalar_lea.vmem %s2, %s398
        %p400 = scmp.lt.s32.totalorder %s27, 1
        %s401 = scalar_select %p400, %s27, 1
        %s402 = smul.addr %s401, 2
        %s403 = smul.addr %s402, 8
        %s404 = scalar_lea.vmem %s3, %s403
        %p405 = scmp.lt.s32.totalorder %s27, 1
        %s406 = scalar_select %p405, %s27, 1
        %s407 = scalar_lea.vmem %s4, %s406
        %v408 = vld [vmem:[%s5] sm:$0xff]
        %v409 = vld [vmem:[%s5 + $0x8] sm:$0xff]
        %v410 = vld [vmem:[%s5 + $0x10] sm:$0xff]
        %v411 = vld [vmem:[%s5 + $0x18] sm:$0xff]
        %v412 = vld [vmem:[%s6] sm:$0xff]
        %v413 = vld [vmem:[%s6 + $0x8] sm:$0x3]
        %v414 = vld [vmem:[%s7] sm:$0x1]
        %v415 = vld [vmem:[%s389] sm:$0x1]
        %vm416 = vcmask 261120
        %v418 = vsel %vm416, %v415, 0
        %420 = vmatpush.msra.mxu0 0.0
        %421 = vmatpush.msra.mxu0 0.0
        %422 = vmatpush.msra.mxu0 0.0
        %423 = vmatpush.msra.mxu0 0.0
        %424 = vmatpush.msra.mxu0 0.0
        %425 = vmatpush.msra.mxu0 0.0
        %426 = vmatpush.msra.mxu0 0.0
        %427 = vmatpush.msra.mxu0 0.0
        %428 = vmatpush.msra.mxu0 0.0
        %429 = vmatpush.msra.mxu0 0.0
        %430 = vmatpush.msra.mxu0 0.0
        %431 = vmatpush.msra.mxu0 0.0
        %432 = vmatpush.msra.mxu0 %v411
        %433 = vmatpush.msra.mxu0 %v410
        %434 = vmatpush.msra.mxu0 %v409
        %435 = vmatpush.msra.mxu0 %v408
        %436 = vmatmul.f32.gmra.mxu0 %v418
        %v437 = vpop.f32.mrf.mxu0
        %v438 = vadd.f32 0.0, %v437
        %439 = vdwg.mxu0
        %v440 = vld [vmem:[%s394] sm:$0xff]
        %v441 = vld [vmem:[%s394 + $0x8] sm:$0xff]
        %vm442 = vcmask 80896
        %v444 = vsel %vm442, %v440, 0
        %v447 = vsel %vm442, %v441, 0
        %vm449 = vcmask 1041408
        %v451 = vsel %vm449, %v413, 0
        %453 = vmatpush.msra.mxu0 0.0
        %454 = vmatpush.msra.mxu0 0.0
        %455 = vmatpush.msra.mxu0 0.0
        %456 = vmatpush.msra.mxu0 0.0
        %457 = vmatpush.msra.mxu0 0.0
        %458 = vmatpush.msra.mxu0 0.0
        %459 = vmatpush.msra.mxu0 0.0
        %460 = vmatpush.msra.mxu0 0.0
        %461 = vmatpush.msra.mxu0 0.0
        %462 = vmatpush.msra.mxu0 0.0
        %463 = vmatpush.msra.mxu0 0.0
        %464 = vmatpush.msra.mxu0 0.0
        %465 = vmatpush.msra.mxu0 0.0
        %466 = vmatpush.msra.mxu0 0.0
        %467 = vmatpush.msra.mxu0 %v451
        %468 = vmatpush.msra.mxu0 %v412
        %469 = vmatmul.f32.gmra.mxu0 %v444
        %v470 = vpop.f32.mrf.mxu0
        %v471 = vadd.f32 0.0, %v470
        %472 = vmatmul.f32.gmra.mxu0 %v447
        %v473 = vpop.f32.mrf.mxu0
        %v474 = vadd.f32 0.0, %v473
        %475 = vdwg.mxu0
        %v476 = vperm.slane %v438, 0
        %v477 = vadd.f32 %v476, %v471
        %v478 = vadd.f32 %v476, %v474
        %v479 = vld [vmem:[%s399] sm:$0xff]
        %v480 = vld [vmem:[%s399 + $0x8] sm:$0xff]
        %v481 = vadd.f32 %v477, %v479
        %v482 = vadd.f32 %v478, %v480
        %v483 = vtanh.pop %v481
        %v484 = vtanh.pop %v482
        %v485 = vld [vmem:[%s407] sm:$0x1]
        %v487 = vsel %vm416, %v414, 0
        %v490 = vsel %vm416, %v483, 0
        %v493 = vsel %vm416, %v484, 0
        %495 = vmatpush.xpose.msra.mxu0 0.0
        %496 = vmatpush.xpose.msra.mxu0 0.0
        %497 = vmatpush.xpose.msra.mxu0 0.0
        %498 = vmatpush.xpose.msra.mxu0 0.0
        %499 = vmatpush.xpose.msra.mxu0 0.0
        %500 = vmatpush.xpose.msra.mxu0 0.0
        %501 = vmatpush.xpose.msra.mxu0 0.0
        %502 = vmatpush.xpose.msra.mxu0 0.0
        %503 = vmatpush.xpose.msra.mxu0 0.0
        %504 = vmatpush.xpose.msra.mxu0 0.0
        %505 = vmatpush.xpose.msra.mxu0 0.0
        %506 = vmatpush.xpose.msra.mxu0 0.0
        %507 = vmatpush.xpose.msra.mxu0 0.0
        %508 = vmatpush.xpose.msra.mxu0 0.0
        %509 = vmatpush.xpose.msra.mxu0 %v493
        %510 = vmatpush.xpose.msra.mxu0 %v490
        %511 = vmatmul.f32.gmra.mxu0 %v487
        %v512 = vpop.f32.mrf.mxu0
        %v513 = vadd.f32 %v485, %v512
        %514 = vdwg.mxu0
        %vm515 = vcmask 122880
        %v516 = vsel %vm515, %v513, -inf
        %517 = vmax.xlane.f32.xlu0 %v516
        %v518 = vpop.xlane.xlu0 %517
        %v519 = vsub.f32 %v513, %v518
        %v520 = vmul.f32 %v519, 1.442695
        %v521 = vpow.pop %v520
        %v522 = vsel %vm515, %v521, 0.0
        %523 = vadd.xlane.f32.xlu0 %v522
        %v524 = vpop.xlane.xlu0 %523
        %v525 = vrcp.pop %v524
        %v526 = vmul.f32 %v521, %v525
        %v527 = vld [vmem:[%s404] sm:$0xff]
        %v528 = vld [vmem:[%s404 + $0x8] sm:$0xff]
        %vm529 = vcmask 130048
        %v531 = vsel %vm529, %v526, 0
        %533 = vmatpush.msra.mxu0 0.0
        %534 = vmatpush.msra.mxu0 0.0
        %535 = vmatpush.msra.mxu0 0.0
        %536 = vmatpush.msra.mxu0 0.0
        %537 = vmatpush.msra.mxu0 0.0
        %538 = vmatpush.msra.mxu0 0.0
        %539 = vmatpush.msra.mxu0 0.0
        %540 = vmatpush.msra.mxu0 0.0
        %541 = vmatpush.msra.mxu0 0.0
        %542 = vmatpush.msra.mxu0 0.0
        %543 = vmatpush.msra.mxu0 0.0
        %544 = vmatpush.msra.mxu0 0.0
        %545 = vmatpush.msra.mxu0 0.0
        %546 = vmatpush.msra.mxu0 0.0
        %547 = vmatpush.msra.mxu0 %v528
        %548 = vmatpush.msra.mxu0 %v527
        %549 = vmatmul.f32.gmra.mxu0 %v531
        %v550 = vpop.f32.mrf.mxu0
        %v551 = vadd.f32 0.0, %v550
        %552 = vdwg.mxu0
        %553 = vst.msk [vmem:[%s386] sm:$0x1] %vm515, %v526
        %vm554 = vcmask 253952
        %555 = vst.msk [vmem:[%s380] sm:$0x1] %vm554, %v551
        %s556 = sand.u32 %s228, 1
        %s557 = scalar_lea.sflag [#allocation3], %s556
        %s558 = sand.u32 %s228, 1
        %s559 = scalar_lea.vmem [#allocation2], %s558
        %s560 = sand.u32 %s254, 1
        %s561 = scalar_lea.sflag [#allocation5], %s560
        %s562 = sand.u32 %s254, 1
        %s563 = scalar_lea.vmem [#allocation4], %s562
        // Predicated region
        $region53: #{attention_forward.1} parent=51 // pred_check
          %p564 = pneg %p238
        $region54: #{attention_forward.1} parent=51 // pred_check_branch
          %566 = sbr.rel (%p564) target = $region56
        $region55: #{attention_forward.1} parent=51 // pred_region
          %568 = vsyncadd %s557, 0
          %s569 = scalar_lea.hbm %s8, %s27
          %s571 = sshll.u32 %s559, 4
          %s572 = int_to_ptr.vmem [resolvable:$true] %s571
          %s573 = sshll.u32 %s569, 4
          %s574 = int_to_ptr.hbm [resolvable:$true] %s573
          %576 = dma.vmem_to_hbm [thread:$0]  %s572, 16, %s574, %s557
        $region56: #{attention_forward.1} parent=51 // pred_fallthru
          _
        // Predicated region
        $region57: #{attention_forward.1} parent=51 // pred_check
          %p577 = pneg %p264
        $region58: #{attention_forward.1} parent=51 // pred_check_branch
          %579 = sbr.rel (%p577) target = $region60
        $region59: #{attention_forward.1} parent=51 // pred_region
          %581 = vsyncadd %s561, 0
          %s582 = scalar_lea.hbm %s9, %s27
          %s584 = sshll.u32 %s563, 4
          %s585 = int_to_ptr.vmem [resolvable:$true] %s584
          %s586 = sshll.u32 %s582, 4
          %s587 = int_to_ptr.hbm [resolvable:$true] %s586
          %589 = dma.vmem_to_hbm [thread:$0]  %s585, 16, %s587, %s561
        $region60: #{attention_forward.1} parent=51 // pred_fallthru
          _
      $region52: #{attention_forward.1} parent=5 // pred_fallthru
        _
      %p590 = scmp.le.s32.totalorder 2, %s22
      // Predicated region
      $region61: #{attention_forward.1} parent=5 // pred_check
        %p591 = pneg %p590
      $region62: #{attention_forward.1} parent=5 // pred_check_branch
        %593 = sbr.rel (%p591) target = $region64
      $region63: #{attention_forward.1} parent=5 // pred_region
        %s594 = ssub.s32 %s22, 2
        // Predicated region
        $region65: #{attention_forward.1} parent=63 // pred_check
          %p595 = pneg %p244
        $region66: #{attention_forward.1} parent=63 // pred_check_branch
          %597 = sbr.rel (%p595) target = $region68
        $region67: #{attention_forward.1} parent=63 // pred_region
          %s598 = sand.u32 %s229, 1
          %s599 = scalar_lea.sflag [#allocation3], %s598
          %s600 = sand.u32 %s229, 1
          %s601 = scalar_lea.vmem [#allocation2], %s600
          %603 = dma.done %s599, 16
        $region68: #{attention_forward.1} parent=63 // pred_fallthru
          _
        // Predicated region
        $region69: #{attention_forward.1} parent=63 // pred_check
          %p604 = pneg %p270
        $region70: #{attention_forward.1} parent=63 // pred_check_branch
          %606 = sbr.rel (%p604) target = $region72
        $region71: #{attention_forward.1} parent=63 // pred_region
          %s607 = sand.u32 %s255, 1
          %s608 = scalar_lea.sflag [#allocation5], %s607
          %s609 = sand.u32 %s255, 1
          %s610 = scalar_lea.vmem [#allocation4], %s609
          %612 = dma.done %s608, 16
        $region72: #{attention_forward.1} parent=63 // pred_fallthru
          _
      $region64: #{attention_forward.1} parent=5 // pred_fallthru
        _
    $region6: #{attention_forward.1} parent=1 // loop_footer
      %s26 = sadd.s32 1, %s22
    $region7: #{attention_forward.1} parent=1 // loop_footer_branch
      %21 = sbr.rel target = $region3
    $region8: #{attention_forward.1} parent=1 // loop_exit
      _
    %613 = vsyncpa [#allocation3], 1
    %s614 = scalar_lea.sflag [#allocation3], 1
    %615 = vsyncpa %s614, 1
    %616 = vsyncpa [#allocation5], 1
    %s617 = scalar_lea.sflag [#allocation5], 1
    %618 = vsyncpa %s617, 1

</llo_original>
